<compile_context>
chip_gen: v5e
topology: v5e:2x2
jax: 0.10.0
libtpu: 0.0.40
codegen_flags: <defaults>
</compile_context>

<pallas_src>
import jax
import jax.numpy as jnp
from jax.experimental import pallas as pl
from jax.experimental.pallas import tpu as pltpu


def _round_up(n, m):
    return (n + m - 1) // m * m


def stability_net_kernel(x_ref, w1_ref, b1_ref, w2_ref, b2_ref, w3_ref, b3_ref, o_ref):
    x = x_ref[...]                                            # (3, TB) fp32

    def affine_vpu(h, w, b):
        # w @ h + b as unrolled VPU broadcast-FMAs.
        #   h: (K, TB), w: (OUT, K), b: (OUT, 1) -> (OUT, TB)
        # w[:, k:k+1] is a lane-broadcast column, h[k:k+1, :] a sublane-broadcast row.
        _, k = w.shape
        acc = b + w[:, 0:1] * h[0:1, :]
        for i in range(1, k):                                 # unrolled at trace time (K <= 16)
            acc = acc + w[:, i:i + 1] * h[i:i + 1, :]
        return acc

    # TODO(synk): optionally run layer math in bf16 on v6e/v7x (bf16 VALU); kept fp32
    # here for v5e parity and tight numerical agreement with the reference.
    h1 = jnp.maximum(affine_vpu(x, w1_ref[...], b1_ref[...]), 0.0)    # (16, TB)
    h2 = jnp.maximum(affine_vpu(h1, w2_ref[...], b2_ref[...]), 0.0)   # (8, TB)
    z3 = affine_vpu(h2, w3_ref[...], b3_ref[...])                     # (1, TB)

    # sigmoid(z) = 1 / (1 + exp(-z)); exp and the approximate reciprocal both go to
    # the EUP, which has its own VLIW slot and is otherwise idle here.
    o_ref[...] = pl.reciprocal(1.0 + jnp.exp(-z3), approx=True)


def stability_net(x, params, *, block_b=4096):
    """x: (B, 3) float32 -> (B, 1) float32."""
    w1, b1, w2, b2, w3, b3 = params
    B = x.shape[0]

    # Lane-dense batch tile: multiple of 128, capped by the (padded) batch size.
    tb = min(block_b, _round_up(B, 128))
    b_pad = _round_up(B, tb)

    # Transposed, zero-padded input: features on sublanes, batch on lanes.
    xt = jnp.zeros((3, b_pad), jnp.float32).at[:, :B].set(x.astype(jnp.float32).T)

    const = lambda i: (0, 0)  # parameters stay resident across all grid steps

    out = pl.pallas_call(
        stability_net_kernel,
        out_shape=jax.ShapeDtypeStruct((1, b_pad), jnp.float32),
        grid_spec=pltpu.PrefetchScalarGridSpec(
            num_scalar_prefetch=0,
            grid=(b_pad // tb,),
            in_specs=[
                pl.BlockSpec((3, tb), lambda i: (0, i)),   # x tile (batch on lanes)
                pl.BlockSpec((16, 3), const),              # w1
                pl.BlockSpec((16, 1), const),              # b1
                pl.BlockSpec((8, 16), const),              # w2
                pl.BlockSpec((8, 1), const),               # b2
                pl.BlockSpec((1, 8), const),               # w3
                pl.BlockSpec((1, 1), const),               # b3
            ],
            out_specs=pl.BlockSpec((1, tb), lambda i: (0, i)),
        ),
        compiler_params=pltpu.CompilerParams(
            dimension_semantics=("parallel",),             # megacore-shard batch tiles (v7x)
        ),
    )(xt, w1, b1, w2, b2, w3, b3)

    return out[:, :B].T                                    # (B, 1)


def init_params(key):
    """nn.Linear-style init; weights stored (out, in), biases stored (out, 1)."""
    k1, k2, k3, k4, k5, k6 = jax.random.split(key, 6)

    def linear(kw, kb, fan_in, fan_out):
        bound = 1.0 / jnp.sqrt(fan_in)
        w = jax.random.uniform(kw, (fan_out, fan_in), jnp.float32, -bound, bound)
        b = jax.random.uniform(kb, (fan_out, 1), jnp.float32, -bound, bound)
        return w, b

    w1, b1 = linear(k1, k2, 3, 16)
    w2, b2 = linear(k3, k4, 16, 8)
    w3, b3 = linear(k5, k6, 8, 1)
    return (w1, b1, w2, b2, w3, b3)


def stability_net_ref(x, params):
    """Pure-JAX reference (PyTorch forward semantics)."""
    w1, b1, w2, b2, w3, b3 = params
    h = jnp.maximum(x @ w1.T + b1[:, 0], 0.0)
    h = jnp.maximum(h @ w2.T + b2[:, 0], 0.0)
    return jax.nn.sigmoid(h @ w3.T + b3[:, 0])


if __name__ == "__main__":
    key = jax.random.PRNGKey(0)
    kx, kp = jax.random.split(key)

    B = 300                                   # small, non-multiple-of-128 batch
    x = jax.random.normal(kx, (B, 3), dtype=jnp.float32)
    params = init_params(kp)

    # block_b=128 so the demo exercises padding + a multi-step grid (3 tiles).
    out = stability_net(x, params, block_b=128)
    out = jax.block_until_ready(out)

    ref = stability_net_ref(x, params)
    assert out.shape == (B, 1)
    # Loose-ish atol covers the EUP approximate reciprocal in the sigmoid; any
    # structural bug would be off by O(0.1) on these [0, 1] outputs.
    assert jnp.allclose(out, ref, atol=5e-3, rtol=0.0)

    print("KERNEL_OK")
</pallas_src>

<mosaic_0001>
module attributes {stable_mosaic.version = 11 : i64} {
  func.func @stability_net_kernel(%arg0: i32, %arg1: memref<3x128xf32, #tpu.memory_space<vmem>>, %arg2: memref<16x3xf32, #tpu.memory_space<vmem>>, %arg3: memref<16x1xf32, #tpu.memory_space<vmem>>, %arg4: memref<8x16xf32, #tpu.memory_space<vmem>>, %arg5: memref<8x1xf32, #tpu.memory_space<vmem>>, %arg6: memref<1x8xf32, #tpu.memory_space<vmem>>, %arg7: memref<1x1xf32, #tpu.memory_space<vmem>>, %arg8: memref<1x128xf32, #tpu.memory_space<vmem>>) attributes {dimension_semantics = [#tpu.dimension_semantics<parallel>], iteration_bounds = array<i64: 3>, scalar_prefetch = 0 : i64, scratch_operands = 0 : i64, tpu.core_type = #tpu.core_type<tc>, window_params = [{transform_indices = @transform_0, window_bounds = array<i64: 3, 128>}, {pipeline_mode = #tpu.pipeline_mode<synchronous>, transform_indices = @transform_1, window_bounds = array<i64: 16, 3>}, {pipeline_mode = #tpu.pipeline_mode<synchronous>, transform_indices = @transform_2, window_bounds = array<i64: 16, 1>}, {pipeline_mode = #tpu.pipeline_mode<synchronous>, transform_indices = @transform_3, window_bounds = array<i64: 8, 16>}, {pipeline_mode = #tpu.pipeline_mode<synchronous>, transform_indices = @transform_4, window_bounds = array<i64: 8, 1>}, {pipeline_mode = #tpu.pipeline_mode<synchronous>, transform_indices = @transform_5, window_bounds = array<i64: 1, 8>}, {pipeline_mode = #tpu.pipeline_mode<synchronous>, transform_indices = @transform_6, window_bounds = array<i64: 1, 1>}, {transform_indices = @transform_7, window_bounds = array<i64: 1, 128>}]} {
    %c0 = arith.constant 0 : index
    %c0_0 = arith.constant 0 : index
    %0 = vector.load %arg1[%c0, %c0_0] : memref<3x128xf32, #tpu.memory_space<vmem>>, vector<3x128xf32>
    %c0_1 = arith.constant 0 : index
    %c0_2 = arith.constant 0 : index
    %1 = vector.load %arg2[%c0_1, %c0_2] : memref<16x3xf32, #tpu.memory_space<vmem>>, vector<16x3xf32>
    %c0_3 = arith.constant 0 : index
    %c0_4 = arith.constant 0 : index
    %2 = vector.load %arg3[%c0_3, %c0_4] : memref<16x1xf32, #tpu.memory_space<vmem>>, vector<16x1xf32>
    %3 = vector.extract_strided_slice %1 {offsets = [0, 0], sizes = [16, 1], strides = [1, 1]} : vector<16x3xf32> to vector<16x1xf32>
    %4 = vector.extract_strided_slice %0 {offsets = [0, 0], sizes = [1, 128], strides = [1, 1]} : vector<3x128xf32> to vector<1x128xf32>
    %5 = vector.broadcast %3 : vector<16x1xf32> to vector<16x128xf32>
    %6 = vector.broadcast %4 : vector<1x128xf32> to vector<16x128xf32>
    %7 = arith.mulf %5, %6 : vector<16x128xf32>
    %8 = vector.broadcast %2 : vector<16x1xf32> to vector<16x128xf32>
    %9 = arith.addf %8, %7 : vector<16x128xf32>
    %10 = vector.extract_strided_slice %1 {offsets = [0, 1], sizes = [16, 1], strides = [1, 1]} : vector<16x3xf32> to vector<16x1xf32>
    %11 = vector.extract_strided_slice %0 {offsets = [1, 0], sizes = [1, 128], strides = [1, 1]} : vector<3x128xf32> to vector<1x128xf32>
    %12 = vector.broadcast %10 : vector<16x1xf32> to vector<16x128xf32>
    %13 = vector.broadcast %11 : vector<1x128xf32> to vector<16x128xf32>
    %14 = arith.mulf %12, %13 : vector<16x128xf32>
    %15 = arith.addf %9, %14 : vector<16x128xf32>
    %16 = vector.extract_strided_slice %1 {offsets = [0, 2], sizes = [16, 1], strides = [1, 1]} : vector<16x3xf32> to vector<16x1xf32>
    %17 = vector.extract_strided_slice %0 {offsets = [2, 0], sizes = [1, 128], strides = [1, 1]} : vector<3x128xf32> to vector<1x128xf32>
    %18 = vector.broadcast %16 : vector<16x1xf32> to vector<16x128xf32>
    %19 = vector.broadcast %17 : vector<1x128xf32> to vector<16x128xf32>
    %20 = arith.mulf %18, %19 : vector<16x128xf32>
    %21 = arith.addf %15, %20 : vector<16x128xf32>
    %cst = arith.constant 0.000000e+00 : f32
    %22 = vector.broadcast %cst : f32 to vector<16x128xf32>
    %23 = arith.maximumf %21, %22 : vector<16x128xf32>
    %c0_5 = arith.constant 0 : index
    %c0_6 = arith.constant 0 : index
    %24 = vector.load %arg4[%c0_5, %c0_6] : memref<8x16xf32, #tpu.memory_space<vmem>>, vector<8x16xf32>
    %c0_7 = arith.constant 0 : index
    %c0_8 = arith.constant 0 : index
    %25 = vector.load %arg5[%c0_7, %c0_8] : memref<8x1xf32, #tpu.memory_space<vmem>>, vector<8x1xf32>
    %26 = vector.extract_strided_slice %24 {offsets = [0, 0], sizes = [8, 1], strides = [1, 1]} : vector<8x16xf32> to vector<8x1xf32>
    %27 = vector.extract_strided_slice %23 {offsets = [0, 0], sizes = [1, 128], strides = [1, 1]} : vector<16x128xf32> to vector<1x128xf32>
    %28 = vector.broadcast %26 : vector<8x1xf32> to vector<8x128xf32>
    %29 = vector.broadcast %27 : vector<1x128xf32> to vector<8x128xf32>
    %30 = arith.mulf %28, %29 : vector<8x128xf32>
    %31 = vector.broadcast %25 : vector<8x1xf32> to vector<8x128xf32>
    %32 = arith.addf %31, %30 : vector<8x128xf32>
    %33 = vector.extract_strided_slice %24 {offsets = [0, 1], sizes = [8, 1], strides = [1, 1]} : vector<8x16xf32> to vector<8x1xf32>
    %34 = vector.extract_strided_slice %23 {offsets = [1, 0], sizes = [1, 128], strides = [1, 1]} : vector<16x128xf32> to vector<1x128xf32>
    %35 = vector.broadcast %33 : vector<8x1xf32> to vector<8x128xf32>
    %36 = vector.broadcast %34 : vector<1x128xf32> to vector<8x128xf32>
    %37 = arith.mulf %35, %36 : vector<8x128xf32>
    %38 = arith.addf %32, %37 : vector<8x128xf32>
    %39 = vector.extract_strided_slice %24 {offsets = [0, 2], sizes = [8, 1], strides = [1, 1]} : vector<8x16xf32> to vector<8x1xf32>
    %40 = vector.extract_strided_slice %23 {offsets = [2, 0], sizes = [1, 128], strides = [1, 1]} : vector<16x128xf32> to vector<1x128xf32>
    %41 = vector.broadcast %39 : vector<8x1xf32> to vector<8x128xf32>
    %42 = vector.broadcast %40 : vector<1x128xf32> to vector<8x128xf32>
    %43 = arith.mulf %41, %42 : vector<8x128xf32>
    %44 = arith.addf %38, %43 : vector<8x128xf32>
    %45 = vector.extract_strided_slice %24 {offsets = [0, 3], sizes = [8, 1], strides = [1, 1]} : vector<8x16xf32> to vector<8x1xf32>
    %46 = vector.extract_strided_slice %23 {offsets = [3, 0], sizes = [1, 128], strides = [1, 1]} : vector<16x128xf32> to vector<1x128xf32>
    %47 = vector.broadcast %45 : vector<8x1xf32> to vector<8x128xf32>
    %48 = vector.broadcast %46 : vector<1x128xf32> to vector<8x128xf32>
    %49 = arith.mulf %47, %48 : vector<8x128xf32>
    %50 = arith.addf %44, %49 : vector<8x128xf32>
    %51 = vector.extract_strided_slice %24 {offsets = [0, 4], sizes = [8, 1], strides = [1, 1]} : vector<8x16xf32> to vector<8x1xf32>
    %52 = vector.extract_strided_slice %23 {offsets = [4, 0], sizes = [1, 128], strides = [1, 1]} : vector<16x128xf32> to vector<1x128xf32>
    %53 = vector.broadcast %51 : vector<8x1xf32> to vector<8x128xf32>
    %54 = vector.broadcast %52 : vector<1x128xf32> to vector<8x128xf32>
    %55 = arith.mulf %53, %54 : vector<8x128xf32>
    %56 = arith.addf %50, %55 : vector<8x128xf32>
    %57 = vector.extract_strided_slice %24 {offsets = [0, 5], sizes = [8, 1], strides = [1, 1]} : vector<8x16xf32> to vector<8x1xf32>
    %58 = vector.extract_strided_slice %23 {offsets = [5, 0], sizes = [1, 128], strides = [1, 1]} : vector<16x128xf32> to vector<1x128xf32>
    %59 = vector.broadcast %57 : vector<8x1xf32> to vector<8x128xf32>
    %60 = vector.broadcast %58 : vector<1x128xf32> to vector<8x128xf32>
    %61 = arith.mulf %59, %60 : vector<8x128xf32>
    %62 = arith.addf %56, %61 : vector<8x128xf32>
    %63 = vector.extract_strided_slice %24 {offsets = [0, 6], sizes = [8, 1], strides = [1, 1]} : vector<8x16xf32> to vector<8x1xf32>
    %64 = vector.extract_strided_slice %23 {offsets = [6, 0], sizes = [1, 128], strides = [1, 1]} : vector<16x128xf32> to vector<1x128xf32>
    %65 = vector.broadcast %63 : vector<8x1xf32> to vector<8x128xf32>
    %66 = vector.broadcast %64 : vector<1x128xf32> to vector<8x128xf32>
    %67 = arith.mulf %65, %66 : vector<8x128xf32>
    %68 = arith.addf %62, %67 : vector<8x128xf32>
    %69 = vector.extract_strided_slice %24 {offsets = [0, 7], sizes = [8, 1], strides = [1, 1]} : vector<8x16xf32> to vector<8x1xf32>
    %70 = vector.extract_strided_slice %23 {offsets = [7, 0], sizes = [1, 128], strides = [1, 1]} : vector<16x128xf32> to vector<1x128xf32>
    %71 = vector.broadcast %69 : vector<8x1xf32> to vector<8x128xf32>
    %72 = vector.broadcast %70 : vector<1x128xf32> to vector<8x128xf32>
    %73 = arith.mulf %71, %72 : vector<8x128xf32>
    %74 = arith.addf %68, %73 : vector<8x128xf32>
    %75 = vector.extract_strided_slice %24 {offsets = [0, 8], sizes = [8, 1], strides = [1, 1]} : vector<8x16xf32> to vector<8x1xf32>
    %76 = vector.extract_strided_slice %23 {offsets = [8, 0], sizes = [1, 128], strides = [1, 1]} : vector<16x128xf32> to vector<1x128xf32>
    %77 = vector.broadcast %75 : vector<8x1xf32> to vector<8x128xf32>
    %78 = vector.broadcast %76 : vector<1x128xf32> to vector<8x128xf32>
    %79 = arith.mulf %77, %78 : vector<8x128xf32>
    %80 = arith.addf %74, %79 : vector<8x128xf32>
    %81 = vector.extract_strided_slice %24 {offsets = [0, 9], sizes = [8, 1], strides = [1, 1]} : vector<8x16xf32> to vector<8x1xf32>
    %82 = vector.extract_strided_slice %23 {offsets = [9, 0], sizes = [1, 128], strides = [1, 1]} : vector<16x128xf32> to vector<1x128xf32>
    %83 = vector.broadcast %81 : vector<8x1xf32> to vector<8x128xf32>
    %84 = vector.broadcast %82 : vector<1x128xf32> to vector<8x128xf32>
    %85 = arith.mulf %83, %84 : vector<8x128xf32>
    %86 = arith.addf %80, %85 : vector<8x128xf32>
    %87 = vector.extract_strided_slice %24 {offsets = [0, 10], sizes = [8, 1], strides = [1, 1]} : vector<8x16xf32> to vector<8x1xf32>
    %88 = vector.extract_strided_slice %23 {offsets = [10, 0], sizes = [1, 128], strides = [1, 1]} : vector<16x128xf32> to vector<1x128xf32>
    %89 = vector.broadcast %87 : vector<8x1xf32> to vector<8x128xf32>
    %90 = vector.broadcast %88 : vector<1x128xf32> to vector<8x128xf32>
    %91 = arith.mulf %89, %90 : vector<8x128xf32>
    %92 = arith.addf %86, %91 : vector<8x128xf32>
    %93 = vector.extract_strided_slice %24 {offsets = [0, 11], sizes = [8, 1], strides = [1, 1]} : vector<8x16xf32> to vector<8x1xf32>
    %94 = vector.extract_strided_slice %23 {offsets = [11, 0], sizes = [1, 128], strides = [1, 1]} : vector<16x128xf32> to vector<1x128xf32>
    %95 = vector.broadcast %93 : vector<8x1xf32> to vector<8x128xf32>
    %96 = vector.broadcast %94 : vector<1x128xf32> to vector<8x128xf32>
    %97 = arith.mulf %95, %96 : vector<8x128xf32>
    %98 = arith.addf %92, %97 : vector<8x128xf32>
    %99 = vector.extract_strided_slice %24 {offsets = [0, 12], sizes = [8, 1], strides = [1, 1]} : vector<8x16xf32> to vector<8x1xf32>
    %100 = vector.extract_strided_slice %23 {offsets = [12, 0], sizes = [1, 128], strides = [1, 1]} : vector<16x128xf32> to vector<1x128xf32>
    %101 = vector.broadcast %99 : vector<8x1xf32> to vector<8x128xf32>
    %102 = vector.broadcast %100 : vector<1x128xf32> to vector<8x128xf32>
    %103 = arith.mulf %101, %102 : vector<8x128xf32>
    %104 = arith.addf %98, %103 : vector<8x128xf32>
    %105 = vector.extract_strided_slice %24 {offsets = [0, 13], sizes = [8, 1], strides = [1, 1]} : vector<8x16xf32> to vector<8x1xf32>
    %106 = vector.extract_strided_slice %23 {offsets = [13, 0], sizes = [1, 128], strides = [1, 1]} : vector<16x128xf32> to vector<1x128xf32>
    %107 = vector.broadcast %105 : vector<8x1xf32> to vector<8x128xf32>
    %108 = vector.broadcast %106 : vector<1x128xf32> to vector<8x128xf32>
    %109 = arith.mulf %107, %108 : vector<8x128xf32>
    %110 = arith.addf %104, %109 : vector<8x128xf32>
    %111 = vector.extract_strided_slice %24 {offsets = [0, 14], sizes = [8, 1], strides = [1, 1]} : vector<8x16xf32> to vector<8x1xf32>
    %112 = vector.extract_strided_slice %23 {offsets = [14, 0], sizes = [1, 128], strides = [1, 1]} : vector<16x128xf32> to vector<1x128xf32>
    %113 = vector.broadcast %111 : vector<8x1xf32> to vector<8x128xf32>
    %114 = vector.broadcast %112 : vector<1x128xf32> to vector<8x128xf32>
    %115 = arith.mulf %113, %114 : vector<8x128xf32>
    %116 = arith.addf %110, %115 : vector<8x128xf32>
    %117 = vector.extract_strided_slice %24 {offsets = [0, 15], sizes = [8, 1], strides = [1, 1]} : vector<8x16xf32> to vector<8x1xf32>
    %118 = vector.extract_strided_slice %23 {offsets = [15, 0], sizes = [1, 128], strides = [1, 1]} : vector<16x128xf32> to vector<1x128xf32>
    %119 = vector.broadcast %117 : vector<8x1xf32> to vector<8x128xf32>
    %120 = vector.broadcast %118 : vector<1x128xf32> to vector<8x128xf32>
    %121 = arith.mulf %119, %120 : vector<8x128xf32>
    %122 = arith.addf %116, %121 : vector<8x128xf32>
    %cst_9 = arith.constant 0.000000e+00 : f32
    %123 = vector.broadcast %cst_9 : f32 to vector<8x128xf32>
    %124 = arith.maximumf %122, %123 : vector<8x128xf32>
    %c0_10 = arith.constant 0 : index
    %c0_11 = arith.constant 0 : index
    %125 = vector.load %arg6[%c0_10, %c0_11] : memref<1x8xf32, #tpu.memory_space<vmem>>, vector<1x8xf32>
    %c0_12 = arith.constant 0 : index
    %c0_13 = arith.constant 0 : index
    %126 = vector.load %arg7[%c0_12, %c0_13] : memref<1x1xf32, #tpu.memory_space<vmem>>, vector<1x1xf32>
    %127 = vector.extract_strided_slice %125 {offsets = [0, 0], sizes = [1, 1], strides = [1, 1]} : vector<1x8xf32> to vector<1x1xf32>
    %128 = vector.extract_strided_slice %124 {offsets = [0, 0], sizes = [1, 128], strides = [1, 1]} : vector<8x128xf32> to vector<1x128xf32>
    %129 = vector.broadcast %127 : vector<1x1xf32> to vector<1x128xf32>
    %130 = arith.mulf %129, %128 : vector<1x128xf32>
    %131 = vector.broadcast %126 : vector<1x1xf32> to vector<1x128xf32>
    %132 = arith.addf %131, %130 : vector<1x128xf32>
    %133 = vector.extract_strided_slice %125 {offsets = [0, 1], sizes = [1, 1], strides = [1, 1]} : vector<1x8xf32> to vector<1x1xf32>
    %134 = vector.extract_strided_slice %124 {offsets = [1, 0], sizes = [1, 128], strides = [1, 1]} : vector<8x128xf32> to vector<1x128xf32>
    %135 = vector.broadcast %133 : vector<1x1xf32> to vector<1x128xf32>
    %136 = arith.mulf %135, %134 : vector<1x128xf32>
    %137 = arith.addf %132, %136 : vector<1x128xf32>
    %138 = vector.extract_strided_slice %125 {offsets = [0, 2], sizes = [1, 1], strides = [1, 1]} : vector<1x8xf32> to vector<1x1xf32>
    %139 = vector.extract_strided_slice %124 {offsets = [2, 0], sizes = [1, 128], strides = [1, 1]} : vector<8x128xf32> to vector<1x128xf32>
    %140 = vector.broadcast %138 : vector<1x1xf32> to vector<1x128xf32>
    %141 = arith.mulf %140, %139 : vector<1x128xf32>
    %142 = arith.addf %137, %141 : vector<1x128xf32>
    %143 = vector.extract_strided_slice %125 {offsets = [0, 3], sizes = [1, 1], strides = [1, 1]} : vector<1x8xf32> to vector<1x1xf32>
    %144 = vector.extract_strided_slice %124 {offsets = [3, 0], sizes = [1, 128], strides = [1, 1]} : vector<8x128xf32> to vector<1x128xf32>
    %145 = vector.broadcast %143 : vector<1x1xf32> to vector<1x128xf32>
    %146 = arith.mulf %145, %144 : vector<1x128xf32>
    %147 = arith.addf %142, %146 : vector<1x128xf32>
    %148 = vector.extract_strided_slice %125 {offsets = [0, 4], sizes = [1, 1], strides = [1, 1]} : vector<1x8xf32> to vector<1x1xf32>
    %149 = vector.extract_strided_slice %124 {offsets = [4, 0], sizes = [1, 128], strides = [1, 1]} : vector<8x128xf32> to vector<1x128xf32>
    %150 = vector.broadcast %148 : vector<1x1xf32> to vector<1x128xf32>
    %151 = arith.mulf %150, %149 : vector<1x128xf32>
    %152 = arith.addf %147, %151 : vector<1x128xf32>
    %153 = vector.extract_strided_slice %125 {offsets = [0, 5], sizes = [1, 1], strides = [1, 1]} : vector<1x8xf32> to vector<1x1xf32>
    %154 = vector.extract_strided_slice %124 {offsets = [5, 0], sizes = [1, 128], strides = [1, 1]} : vector<8x128xf32> to vector<1x128xf32>
    %155 = vector.broadcast %153 : vector<1x1xf32> to vector<1x128xf32>
    %156 = arith.mulf %155, %154 : vector<1x128xf32>
    %157 = arith.addf %152, %156 : vector<1x128xf32>
    %158 = vector.extract_strided_slice %125 {offsets = [0, 6], sizes = [1, 1], strides = [1, 1]} : vector<1x8xf32> to vector<1x1xf32>
    %159 = vector.extract_strided_slice %124 {offsets = [6, 0], sizes = [1, 128], strides = [1, 1]} : vector<8x128xf32> to vector<1x128xf32>
    %160 = vector.broadcast %158 : vector<1x1xf32> to vector<1x128xf32>
    %161 = arith.mulf %160, %159 : vector<1x128xf32>
    %162 = arith.addf %157, %161 : vector<1x128xf32>
    %163 = vector.extract_strided_slice %125 {offsets = [0, 7], sizes = [1, 1], strides = [1, 1]} : vector<1x8xf32> to vector<1x1xf32>
    %164 = vector.extract_strided_slice %124 {offsets = [7, 0], sizes = [1, 128], strides = [1, 1]} : vector<8x128xf32> to vector<1x128xf32>
    %165 = vector.broadcast %163 : vector<1x1xf32> to vector<1x128xf32>
    %166 = arith.mulf %165, %164 : vector<1x128xf32>
    %167 = arith.addf %162, %166 : vector<1x128xf32>
    %cst_14 = arith.constant 0.000000e+00 : f32
    %168 = vector.broadcast %cst_14 : f32 to vector<1x128xf32>
    %169 = arith.subf %168, %167 : vector<1x128xf32>
    %170 = math.exp %169 : vector<1x128xf32>
    %cst_15 = arith.constant 1.000000e+00 : f32
    %171 = vector.broadcast %cst_15 : f32 to vector<1x128xf32>
    %172 = arith.addf %171, %170 : vector<1x128xf32>
    %173 = tpu.reciprocal %172 {approx = true} : vector<1x128xf32> -> vector<1x128xf32>
    %c0_16 = arith.constant 0 : index
    %c0_17 = arith.constant 0 : index
    %174 = vector.load %arg8[%c0_16, %c0_17] : memref<1x128xf32, #tpu.memory_space<vmem>>, vector<1x128xf32>
    tpu.vector_store %arg8[%c0_16, %c0_17], %173 {strides = array<i32>} : memref<1x128xf32, #tpu.memory_space<vmem>>, vector<1x128xf32>,
    return
  }
  func.func @transform_0(%arg0: i32) -> (i32, i32) {
    %c0_i32 = arith.constant 0 : i32
    %c0_i32_0 = arith.constant 0 : i32
    return %c0_i32, %arg0 : i32, i32
  }
  func.func @transform_1(%arg0: i32) -> (i32, i32) {
    %c0_i32 = arith.constant 0 : i32
    %c0_i32_0 = arith.constant 0 : i32
    %c0_i32_1 = arith.constant 0 : i32
    return %c0_i32, %c0_i32_0 : i32, i32
  }
  func.func @transform_2(%arg0: i32) -> (i32, i32) {
    %c0_i32 = arith.constant 0 : i32
    %c0_i32_0 = arith.constant 0 : i32
    %c0_i32_1 = arith.constant 0 : i32
    return %c0_i32, %c0_i32_0 : i32, i32
  }
  func.func @transform_3(%arg0: i32) -> (i32, i32) {
    %c0_i32 = arith.constant 0 : i32
    %c0_i32_0 = arith.constant 0 : i32
    %c0_i32_1 = arith.constant 0 : i32
    return %c0_i32, %c0_i32_0 : i32, i32
  }
  func.func @transform_4(%arg0: i32) -> (i32, i32) {
    %c0_i32 = arith.constant 0 : i32
    %c0_i32_0 = arith.constant 0 : i32
    %c0_i32_1 = arith.constant 0 : i32
    return %c0_i32, %c0_i32_0 : i32, i32
  }
  func.func @transform_5(%arg0: i32) -> (i32, i32) {
    %c0_i32 = arith.constant 0 : i32
    %c0_i32_0 = arith.constant 0 : i32
    %c0_i32_1 = arith.constant 0 : i32
    return %c0_i32, %c0_i32_0 : i32, i32
  }
  func.func @transform_6(%arg0: i32) -> (i32, i32) {
    %c0_i32 = arith.constant 0 : i32
    %c0_i32_0 = arith.constant 0 : i32
    %c0_i32_1 = arith.constant 0 : i32
    return %c0_i32, %c0_i32_0 : i32, i32
  }
  func.func @transform_7(%arg0: i32) -> (i32, i32) {
    %c0_i32 = arith.constant 0 : i32
    %c0_i32_0 = arith.constant 0 : i32
    return %c0_i32, %arg0 : i32, i32
  }
}

</mosaic_0001>

<llo_original>
// kernel: tpu_custom_call.1
$region0: #{tpu_custom_call.1}
  #allocation0 [shape = 'u32[]', space=smem, size = 0x4, offset = 0x4, fixed_abs, tag = 'smem constant byte address 0x4 - core index']
  #allocation1 [shape = 'u32[72,128]{1,0:T(1,128)}', space=vmem, size = 0x9000, scoped, tag = 'internal scratch']
  #allocation2 [shape = 'f32[1,1]{1,0:T(1,128)S(1)}', space=vmem, size = 0x200, scoped, tag = 'scoped memory for tpu_custom_call.1']
  %s0 = inlined_call_operand.vmem [shape: f32[3,384], index: 0, kind: input, shape index: {}]
  %s1 = inlined_call_operand.vmem [shape: f32[16,3], index: 1, kind: input, shape index: {}]
  %s2 = inlined_call_operand.vmem [shape: f32[16,1], index: 2, kind: input, shape index: {}]
  %s3 = inlined_call_operand.vmem [shape: f32[8,16], index: 3, kind: input, shape index: {}]
  %s4 = inlined_call_operand.vmem [shape: f32[8,1], index: 4, kind: input, shape index: {}]
  %s5 = inlined_call_operand.vmem [shape: f32[1,8], index: 5, kind: input, shape index: {}]
  %s6 = inlined_call_operand.<no memory space> [shape: f32[1,1], index: 6, kind: input, shape index: {}]
  %s7 = inlined_call_operand.hbm [shape: f32[1,384], index: 7, kind: output, shape index: {}]
  %s8 = sld [smem:[#allocation0]]
  $region61: #{tpu_custom_call.1} parent=0
    _
  %s10 = ssub.s32 1, %s8
  %s11 = scalar_select 0, %s10, %s8
  %v12 = vstv %s6
  %13 = vst [vmem:[#allocation2] sm:$0x1] %v12
  $region1: #{tpu_custom_call.1} parent=0
    #allocation3 [shape = 'u8[1024]{0}', space=vmem, size = 0x400, scoped, tag = 'output window, operand 0']
    #allocation4 [shape = 's32[2]{0}', space=sflag, size = 0x8, scoped, tag = 'scoped memory for tpu_custom_call.1']
    %14 = vsyncpa [#allocation4], 0
    %s15 = scalar_lea.sflag [#allocation4], 1
    %16 = vsyncpa %s15, 0
    loop: start=0, step=1, limit=5
    $region2: #{tpu_custom_call.1} parent=1 // loop_pre_header
      _
    $region3: #{tpu_custom_call.1} parent=1 // loop_header
      %s18 = sphi 0, %s22
      %p19 = scmp.ge.s32.totalorder %s18, 5
      %s28 = sphi 0, %s30
      %s31 = sphi 0, %s28
      %s32 = sphi 0, %s31
      %s48 = sphi 0, %s32
      %s52 = sphi 0, %s52
      %s54 = sphi 0, %s52
      %s55 = sphi 0, %s54
      %s69 = sphi 0, %s55
      %s73 = sphi 0, %s73
      %s75 = sphi 0, %s73
      %s76 = sphi 0, %s75
      %s90 = sphi 0, %s76
      %s94 = sphi 0, %s94
      %s96 = sphi 0, %s94
      %s97 = sphi 0, %s96
      %s111 = sphi 0, %s97
      %s115 = sphi 0, %s115
      %s117 = sphi 0, %s115
      %s118 = sphi 0, %s117
      %s132 = sphi 0, %s118
      %s136 = sphi 0, %s136
      %s138 = sphi 0, %s136
      %s139 = sphi 0, %s138
      %s153 = sphi 0, %s139
      %s157 = sphi 0, %s157
      %s159 = sphi 0, %s157
      %s160 = sphi 0, %s159
      %s174 = sphi 0, %s160
      %s180 = sphi 0, %s182
      %s183 = sphi 0, %s180
      %s184 = sphi 0, %s183
      %s200 = sphi 0, %s184
    $region4: #{tpu_custom_call.1} parent=1 // loop_header_branch
      %21 = sbr.rel (%p19) target = $region8
    $region5: #{tpu_custom_call.1} parent=1 // loop_body
      %s23 = ssub.s32 %s18, 1
      %s24 = ssub.s32 %s18, 2
      %s25 = sadd.s32 %s18, 1
      %s26 = ssub.s32 %s18, %s25
      %p27 = scmp.eq.s32.totalorder %s26, 0
      %s29 = sadd.s32 %s28, 1
      %s30 = scalar_select %p27, %s28, %s29
      %p33 = pneg %p27
      %p34 = scmp.eq.s32.totalorder %s18, 2
      %p35 = por %p33, %p34
      %p36 = scmp.ne.s32.totalorder %s28, %s31
      %p37 = scmp.eq.s32.totalorder %s18, 0
      %p38 = por %p36, %p37
      %p39 = scmp.ne.s32.totalorder %s28, %s31
      %p40 = scmp.eq.s32.totalorder %s23, 2
      %p41 = por %p39, %p40
      %p42 = scmp.ne.s32.totalorder %s31, %s32
      %p43 = scmp.eq.s32.totalorder %s23, 0
      %p44 = por %p42, %p43
      %p45 = scmp.ne.s32.totalorder %s31, %s32
      %p46 = scmp.eq.s32.totalorder %s24, 2
      %p47 = por %p45, %p46
      %p49 = scmp.ne.s32.totalorder %s32, %s48
      %p50 = scmp.eq.s32.totalorder %s24, 0
      %p51 = por %p49, %p50
      %s53 = sadd.s32 %s52, 1
      %p56 = scmp.eq.s32.totalorder %s18, 2
      %p57 = scmp.ne.s32.totalorder %s52, %s54
      %p58 = scmp.eq.s32.totalorder %s18, 0
      %p59 = por %p57, %p58
      %p60 = scmp.ne.s32.totalorder %s52, %s54
      %p61 = scmp.eq.s32.totalorder %s23, 2
      %p62 = por %p60, %p61
      %p63 = scmp.ne.s32.totalorder %s54, %s55
      %p64 = scmp.eq.s32.totalorder %s23, 0
      %p65 = por %p63, %p64
      %p66 = scmp.ne.s32.totalorder %s54, %s55
      %p67 = scmp.eq.s32.totalorder %s24, 2
      %p68 = por %p66, %p67
      %p70 = scmp.ne.s32.totalorder %s55, %s69
      %p71 = scmp.eq.s32.totalorder %s24, 0
      %p72 = por %p70, %p71
      %s74 = sadd.s32 %s73, 1
      %p77 = scmp.eq.s32.totalorder %s18, 2
      %p78 = scmp.ne.s32.totalorder %s73, %s75
      %p79 = scmp.eq.s32.totalorder %s18, 0
      %p80 = por %p78, %p79
      %p81 = scmp.ne.s32.totalorder %s73, %s75
      %p82 = scmp.eq.s32.totalorder %s23, 2
      %p83 = por %p81, %p82
      %p84 = scmp.ne.s32.totalorder %s75, %s76
      %p85 = scmp.eq.s32.totalorder %s23, 0
      %p86 = por %p84, %p85
      %p87 = scmp.ne.s32.totalorder %s75, %s76
      %p88 = scmp.eq.s32.totalorder %s24, 2
      %p89 = por %p87, %p88
      %p91 = scmp.ne.s32.totalorder %s76, %s90
      %p92 = scmp.eq.s32.totalorder %s24, 0
      %p93 = por %p91, %p92
      %s95 = sadd.s32 %s94, 1
      %p98 = scmp.eq.s32.totalorder %s18, 2
      %p99 = scmp.ne.s32.totalorder %s94, %s96
      %p100 = scmp.eq.s32.totalorder %s18, 0
      %p101 = por %p99, %p100
      %p102 = scmp.ne.s32.totalorder %s94, %s96
      %p103 = scmp.eq.s32.totalorder %s23, 2
      %p104 = por %p102, %p103
      %p105 = scmp.ne.s32.totalorder %s96, %s97
      %p106 = scmp.eq.s32.totalorder %s23, 0
      %p107 = por %p105, %p106
      %p108 = scmp.ne.s32.totalorder %s96, %s97
      %p109 = scmp.eq.s32.totalorder %s24, 2
      %p110 = por %p108, %p109
      %p112 = scmp.ne.s32.totalorder %s97, %s111
      %p113 = scmp.eq.s32.totalorder %s24, 0
      %p114 = por %p112, %p113
      %s116 = sadd.s32 %s115, 1
      %p119 = scmp.eq.s32.totalorder %s18, 2
      %p120 = scmp.ne.s32.totalorder %s115, %s117
      %p121 = scmp.eq.s32.totalorder %s18, 0
      %p122 = por %p120, %p121
      %p123 = scmp.ne.s32.totalorder %s115, %s117
      %p124 = scmp.eq.s32.totalorder %s23, 2
      %p125 = por %p123, %p124
      %p126 = scmp.ne.s32.totalorder %s117, %s118
      %p127 = scmp.eq.s32.totalorder %s23, 0
      %p128 = por %p126, %p127
      %p129 = scmp.ne.s32.totalorder %s117, %s118
      %p130 = scmp.eq.s32.totalorder %s24, 2
      %p131 = por %p129, %p130
      %p133 = scmp.ne.s32.totalorder %s118, %s132
      %p134 = scmp.eq.s32.totalorder %s24, 0
      %p135 = por %p133, %p134
      %s137 = sadd.s32 %s136, 1
      %p140 = scmp.eq.s32.totalorder %s18, 2
      %p141 = scmp.ne.s32.totalorder %s136, %s138
      %p142 = scmp.eq.s32.totalorder %s18, 0
      %p143 = por %p141, %p142
      %p144 = scmp.ne.s32.totalorder %s136, %s138
      %p145 = scmp.eq.s32.totalorder %s23, 2
      %p146 = por %p144, %p145
      %p147 = scmp.ne.s32.totalorder %s138, %s139
      %p148 = scmp.eq.s32.totalorder %s23, 0
      %p149 = por %p147, %p148
      %p150 = scmp.ne.s32.totalorder %s138, %s139
      %p151 = scmp.eq.s32.totalorder %s24, 2
      %p152 = por %p150, %p151
      %p154 = scmp.ne.s32.totalorder %s139, %s153
      %p155 = scmp.eq.s32.totalorder %s24, 0
      %p156 = por %p154, %p155
      %s158 = sadd.s32 %s157, 1
      %p161 = scmp.eq.s32.totalorder %s18, 2
      %p162 = scmp.ne.s32.totalorder %s157, %s159
      %p163 = scmp.eq.s32.totalorder %s18, 0
      %p164 = por %p162, %p163
      %p165 = scmp.ne.s32.totalorder %s157, %s159
      %p166 = scmp.eq.s32.totalorder %s23, 2
      %p167 = por %p165, %p166
      %p168 = scmp.ne.s32.totalorder %s159, %s160
      %p169 = scmp.eq.s32.totalorder %s23, 0
      %p170 = por %p168, %p169
      %p171 = scmp.ne.s32.totalorder %s159, %s160
      %p172 = scmp.eq.s32.totalorder %s24, 2
      %p173 = por %p171, %p172
      %p175 = scmp.ne.s32.totalorder %s160, %s174
      %p176 = scmp.eq.s32.totalorder %s24, 0
      %p177 = por %p175, %p176
      %s178 = ssub.s32 %s18, %s25
      %p179 = scmp.eq.s32.totalorder %s178, 0
      %s181 = sadd.s32 %s180, 1
      %s182 = scalar_select %p179, %s180, %s181
      %p185 = pneg %p179
      %p186 = scmp.eq.s32.totalorder %s18, 2
      %p187 = por %p185, %p186
      %p188 = scmp.ne.s32.totalorder %s180, %s183
      %p189 = scmp.eq.s32.totalorder %s18, 0
      %p190 = por %p188, %p189
      %p191 = scmp.ne.s32.totalorder %s180, %s183
      %p192 = scmp.eq.s32.totalorder %s23, 2
      %p193 = por %p191, %p192
      %p194 = scmp.ne.s32.totalorder %s183, %s184
      %p195 = scmp.eq.s32.totalorder %s23, 0
      %p196 = por %p194, %p195
      %p197 = scmp.ne.s32.totalorder %s183, %s184
      %p198 = scmp.eq.s32.totalorder %s24, 2
      %p199 = por %p197, %p198
      %p201 = scmp.ne.s32.totalorder %s184, %s200
      %p202 = scmp.eq.s32.totalorder %s24, 0
      %p203 = por %p201, %p202
      %p204 = scmp.le.s32.totalorder 1, %s18
      %p205 = scmp.lt.s32.totalorder %s18, 4
      %p206 = pnand %p204, %p205
      %p207 = pneg %p206
      // Predicated region
      $region9: #{tpu_custom_call.1} parent=5 // pred_check
        _
      $region10: #{tpu_custom_call.1} parent=5 // pred_check_branch
        %209 = sbr.rel (%p206) target = $region12
      $region11: #{tpu_custom_call.1} parent=5 // pred_region
        %s210 = ssub.s32 %s18, 1
        // Predicated region
        $region13: #{tpu_custom_call.1} parent=11 // pred_check
          %p211 = pneg %p65
        $region14: #{tpu_custom_call.1} parent=11 // pred_check_branch
          %213 = sbr.rel (%p211) target = $region16
        $region15: #{tpu_custom_call.1} parent=11 // pred_region
          _
        $region16: #{tpu_custom_call.1} parent=11 // pred_fallthru
          _
        // Predicated region
        $region17: #{tpu_custom_call.1} parent=11 // pred_check
          %p214 = pneg %p86
        $region18: #{tpu_custom_call.1} parent=11 // pred_check_branch
          %216 = sbr.rel (%p214) target = $region20
        $region19: #{tpu_custom_call.1} parent=11 // pred_region
          _
        $region20: #{tpu_custom_call.1} parent=11 // pred_fallthru
          _
        // Predicated region
        $region21: #{tpu_custom_call.1} parent=11 // pred_check
          %p217 = pneg %p107
        $region22: #{tpu_custom_call.1} parent=11 // pred_check_branch
          %219 = sbr.rel (%p217) target = $region24
        $region23: #{tpu_custom_call.1} parent=11 // pred_region
          _
        $region24: #{tpu_custom_call.1} parent=11 // pred_fallthru
          _
        // Predicated region
        $region25: #{tpu_custom_call.1} parent=11 // pred_check
          %p220 = pneg %p128
        $region26: #{tpu_custom_call.1} parent=11 // pred_check_branch
          %222 = sbr.rel (%p220) target = $region28
        $region27: #{tpu_custom_call.1} parent=11 // pred_region
          _
        $region28: #{tpu_custom_call.1} parent=11 // pred_fallthru
          _
        // Predicated region
        $region29: #{tpu_custom_call.1} parent=11 // pred_check
          %p223 = pneg %p149
        $region30: #{tpu_custom_call.1} parent=11 // pred_check_branch
          %225 = sbr.rel (%p223) target = $region32
        $region31: #{tpu_custom_call.1} parent=11 // pred_region
          _
        $region32: #{tpu_custom_call.1} parent=11 // pred_fallthru
          _
        // Predicated region
        $region33: #{tpu_custom_call.1} parent=11 // pred_check
          %p226 = pneg %p170
        $region34: #{tpu_custom_call.1} parent=11 // pred_check_branch
          %228 = sbr.rel (%p226) target = $region36
        $region35: #{tpu_custom_call.1} parent=11 // pred_region
          _
        $region36: #{tpu_custom_call.1} parent=11 // pred_fallthru
          _
      $region12: #{tpu_custom_call.1} parent=5 // pred_fallthru
        _
      %p229 = scmp.lt.s32.totalorder %s18, 3
      // Predicated region
      $region37: #{tpu_custom_call.1} parent=5 // pred_check
        %p230 = pneg %p229
      $region38: #{tpu_custom_call.1} parent=5 // pred_check_branch
        %232 = sbr.rel (%p230) target = $region40
      $region39: #{tpu_custom_call.1} parent=5 // pred_region
        // Predicated region
        $region41: #{tpu_custom_call.1} parent=39 // pred_check
          %p233 = pneg %p38
        $region42: #{tpu_custom_call.1} parent=39 // pred_check_branch
          %235 = sbr.rel (%p233) target = $region44
        $region43: #{tpu_custom_call.1} parent=39 // pred_region
          %p236 = scmp.lt.s32.totalorder %s18, 2
          %s237 = scalar_select %p236, %s18, 2
          %s238 = smul.addr %s237, 4
          %s239 = scalar_lea.vmem %s0, %s238
        $region44: #{tpu_custom_call.1} parent=39 // pred_fallthru
          _
      $region40: #{tpu_custom_call.1} parent=5 // pred_fallthru
        _
      %p240 = scmp.le.s32.totalorder 1, %s18
      %p241 = scmp.lt.s32.totalorder %s18, 4
      %p242 = pnand %p240, %p241
      %p243 = pneg %p242
      // Predicated region
      $region45: #{tpu_custom_call.1} parent=5 // pred_check
        _
      $region46: #{tpu_custom_call.1} parent=5 // pred_check_branch
        %245 = sbr.rel (%p242) target = $region48
      $region47: #{tpu_custom_call.1} parent=5 // pred_region
        %s246 = ssub.s32 %s18, 1
        %p247 = scmp.lt.s32.totalorder %s23, 2
        %s248 = scalar_select %p247, %s23, 2
        %s249 = smul.addr %s248, 4
        %s250 = scalar_lea.vmem %s0, %s249
        %p251 = pneg %p44
        %p252 = pneg %p41
        %p253 = pneg %p65
        %p254 = pneg %p62
        %p255 = pneg %p86
        %p256 = pneg %p83
        %p257 = pneg %p107
        %p258 = pneg %p104
        %p259 = pneg %p128
        %p260 = pneg %p125
        %p261 = pneg %p149
        %p262 = pneg %p146
        %p263 = pneg %p170
        %p264 = pneg %p167
        %p265 = pneg %p196
        %p266 = pneg %p193
        %s267 = sand.u32 %s183, 1
        %s268 = scalar_lea.sflag [#allocation4], %s267
        %s269 = sand.u32 %s183, 1
        %s270 = scalar_lea.vmem [#allocation3], %s269
        %p271 = scmp.lt.s32.totalorder %s23, 2
        %s272 = scalar_select %p271, %s23, 2
        %s273 = smul.addr %s272, 4
        %s274 = scalar_lea.vmem %s0, %s273
        %v275 = vld [vmem:[%s274] sm:$0x7]
        %v276 = vld [vmem:[%s1] sm:$0xff]
        %v277 = vld [vmem:[%s1 + $0x8] sm:$0xff]
        %v278 = vld [vmem:[%s2] sm:$0xff]
        %v279 = vld [vmem:[%s2 + $0x8] sm:$0xff]
        %281 = vset.pattern.permute.xlu0 0
        %282 = vperm.xlu0 %281, %v276
        %v283 = vpop.permute.xlu0 %282
        %286 = vset.pattern.permute.xlu0 0
        %287 = vperm.xlu0 %286, %v277
        %v288 = vpop.permute.xlu0 %287
        %v290 = vperm.slane %v275, 0
        %v291 = vmul.f32 %v283, %v290
        %v292 = vmul.f32 %v288, %v290
        %294 = vset.pattern.permute.xlu0 0
        %295 = vperm.xlu0 %294, %v278
        %v296 = vpop.permute.xlu0 %295
        %299 = vset.pattern.permute.xlu0 0
        %300 = vperm.xlu0 %299, %v279
        %v301 = vpop.permute.xlu0 %300
        %v303 = vadd.f32 %v296, %v291
        %v304 = vadd.f32 %v301, %v292
        %305 = vset.pattern.permute.xlu0 1
        %306 = vperm.xlu0 %305, %v276
        %v307 = vpop.permute.xlu0 %306
        %309 = vset.pattern.permute.xlu0 1
        %310 = vperm.xlu0 %309, %v277
        %v311 = vpop.permute.xlu0 %310
        %v313 = vperm.slane %v275, 1
        %v314 = vmul.f32 %v307, %v313
        %v315 = vmul.f32 %v311, %v313
        %v316 = vadd.f32 %v303, %v314
        %v317 = vadd.f32 %v304, %v315
        %318 = vset.pattern.permute.xlu0 2
        %319 = vperm.xlu0 %318, %v276
        %v320 = vpop.permute.xlu0 %319
        %322 = vset.pattern.permute.xlu0 2
        %323 = vperm.xlu0 %322, %v277
        %v324 = vpop.permute.xlu0 %323
        %v326 = vperm.slane %v275, 2
        %v327 = vmul.f32 %v320, %v326
        %v328 = vmul.f32 %v324, %v326
        %v329 = vadd.f32 %v316, %v327
        %v330 = vadd.f32 %v317, %v328
        %v331 = vmax.f32 %v329, 0.0
        %v332 = vmax.f32 %v330, 0.0
        %v333 = vld [vmem:[%s3] sm:$0xff]
        %v334 = vld [vmem:[%s4] sm:$0xff]
        %336 = vset.pattern.permute.xlu0 0
        %337 = vperm.xlu0 %336, %v333
        %v338 = vpop.permute.xlu0 %337
        %v340 = vperm.slane %v331, 0
        %v341 = vmul.f32 %v338, %v340
        %343 = vset.pattern.permute.xlu0 0
        %344 = vperm.xlu0 %343, %v334
        %v345 = vpop.permute.xlu0 %344
        %v347 = vadd.f32 %v345, %v341
        %348 = vset.pattern.permute.xlu0 1
        %349 = vperm.xlu0 %348, %v333
        %v350 = vpop.permute.xlu0 %349
        %v352 = vperm.slane %v331, 1
        %v353 = vmul.f32 %v350, %v352
        %v354 = vadd.f32 %v347, %v353
        %355 = vset.pattern.permute.xlu0 2
        %356 = vperm.xlu0 %355, %v333
        %v357 = vpop.permute.xlu0 %356
        %v359 = vperm.slane %v331, 2
        %v360 = vmul.f32 %v357, %v359
        %v361 = vadd.f32 %v354, %v360
        %362 = vset.pattern.permute.xlu0 3
        %363 = vperm.xlu0 %362, %v333
        %v364 = vpop.permute.xlu0 %363
        %v366 = vperm.slane %v331, 3
        %v367 = vmul.f32 %v364, %v366
        %v368 = vadd.f32 %v361, %v367
        %369 = vset.pattern.permute.xlu0 4
        %370 = vperm.xlu0 %369, %v333
        %v371 = vpop.permute.xlu0 %370
        %v373 = vperm.slane %v331, 4
        %v374 = vmul.f32 %v371, %v373
        %v375 = vadd.f32 %v368, %v374
        %376 = vset.pattern.permute.xlu0 5
        %377 = vperm.xlu0 %376, %v333
        %v378 = vpop.permute.xlu0 %377
        %v380 = vperm.slane %v331, 5
        %v381 = vmul.f32 %v378, %v380
        %v382 = vadd.f32 %v375, %v381
        %383 = vset.pattern.permute.xlu0 6
        %384 = vperm.xlu0 %383, %v333
        %v385 = vpop.permute.xlu0 %384
        %v387 = vperm.slane %v331, 6
        %v388 = vmul.f32 %v385, %v387
        %v389 = vadd.f32 %v382, %v388
        %390 = vset.pattern.permute.xlu0 7
        %391 = vperm.xlu0 %390, %v333
        %v392 = vpop.permute.xlu0 %391
        %v394 = vperm.slane %v331, 7
        %v395 = vmul.f32 %v392, %v394
        %v396 = vadd.f32 %v389, %v395
        %397 = vset.pattern.permute.xlu0 8
        %398 = vperm.xlu0 %397, %v333
        %v399 = vpop.permute.xlu0 %398
        %v401 = vperm.slane %v332, 0
        %v402 = vmul.f32 %v399, %v401
        %v403 = vadd.f32 %v396, %v402
        %404 = vset.pattern.permute.xlu0 9
        %405 = vperm.xlu0 %404, %v333
        %v406 = vpop.permute.xlu0 %405
        %v408 = vperm.slane %v332, 1
        %v409 = vmul.f32 %v406, %v408
        %v410 = vadd.f32 %v403, %v409
        %411 = vset.pattern.permute.xlu0 10
        %412 = vperm.xlu0 %411, %v333
        %v413 = vpop.permute.xlu0 %412
        %v415 = vperm.slane %v332, 2
        %v416 = vmul.f32 %v413, %v415
        %v417 = vadd.f32 %v410, %v416
        %418 = vset.pattern.permute.xlu0 11
        %419 = vperm.xlu0 %418, %v333
        %v420 = vpop.permute.xlu0 %419
        %v422 = vperm.slane %v332, 3
        %v423 = vmul.f32 %v420, %v422
        %v424 = vadd.f32 %v417, %v423
        %425 = vset.pattern.permute.xlu0 12
        %426 = vperm.xlu0 %425, %v333
        %v427 = vpop.permute.xlu0 %426
        %v429 = vperm.slane %v332, 4
        %v430 = vmul.f32 %v427, %v429
        %v431 = vadd.f32 %v424, %v430
        %432 = vset.pattern.permute.xlu0 13
        %433 = vperm.xlu0 %432, %v333
        %v434 = vpop.permute.xlu0 %433
        %v436 = vperm.slane %v332, 5
        %v437 = vmul.f32 %v434, %v436
        %v438 = vadd.f32 %v431, %v437
        %439 = vset.pattern.permute.xlu0 14
        %440 = vperm.xlu0 %439, %v333
        %v441 = vpop.permute.xlu0 %440
        %v443 = vperm.slane %v332, 6
        %v444 = vmul.f32 %v441, %v443
        %v445 = vadd.f32 %v438, %v444
        %446 = vset.pattern.permute.xlu0 15
        %447 = vperm.xlu0 %446, %v333
        %v448 = vpop.permute.xlu0 %447
        %v450 = vperm.slane %v332, 7
        %v451 = vmul.f32 %v448, %v450
        %v452 = vadd.f32 %v445, %v451
        %v453 = vmax.f32 %v452, 0.0
        %v454 = vld [vmem:[%s5] sm:$0x1]
        %v455 = vld [vmem:[#allocation2] sm:$0x1]
        %457 = vset.pattern.permute.xlu0 0
        %458 = vperm.xlu0 %457, %v454
        %v459 = vpop.permute.xlu0 %458
        %v461 = vperm.slane %v459, 0
        %v462 = vmul.f32 %v461, %v453
        %464 = vset.pattern.permute.xlu0 0
        %465 = vperm.xlu0 %464, %v455
        %v466 = vpop.permute.xlu0 %465
        %v468 = vperm.slane %v466, 0
        %v469 = vadd.f32 %v468, %v462
        %470 = vset.pattern.permute.xlu0 1
        %471 = vperm.xlu0 %470, %v454
        %v472 = vpop.permute.xlu0 %471
        %v474 = vperm.slane %v472, 0
        %v475 = vmul.f32 %v474, %v453
        %v477 = vrot.slane %v475, 1
        %v479 = vadd.f32 %v469, %v477
        %480 = vset.pattern.permute.xlu0 2
        %481 = vperm.xlu0 %480, %v454
        %v482 = vpop.permute.xlu0 %481
        %v484 = vperm.slane %v482, 0
        %v485 = vmul.f32 %v484, %v453
        %v487 = vrot.slane %v485, 2
        %v489 = vadd.f32 %v479, %v487
        %490 = vset.pattern.permute.xlu0 3
        %491 = vperm.xlu0 %490, %v454
        %v492 = vpop.permute.xlu0 %491
        %v494 = vperm.slane %v492, 0
        %v495 = vmul.f32 %v494, %v453
        %v497 = vrot.slane %v495, 3
        %v499 = vadd.f32 %v489, %v497
        %500 = vset.pattern.permute.xlu0 4
        %501 = vperm.xlu0 %500, %v454
        %v502 = vpop.permute.xlu0 %501
        %v504 = vperm.slane %v502, 0
        %v505 = vmul.f32 %v504, %v453
        %v507 = vrot.slane %v505, 4
        %v509 = vadd.f32 %v499, %v507
        %510 = vset.pattern.permute.xlu0 5
        %511 = vperm.xlu0 %510, %v454
        %v512 = vpop.permute.xlu0 %511
        %v514 = vperm.slane %v512, 0
        %v515 = vmul.f32 %v514, %v453
        %v517 = vrot.slane %v515, 5
        %v519 = vadd.f32 %v509, %v517
        %520 = vset.pattern.permute.xlu0 6
        %521 = vperm.xlu0 %520, %v454
        %v522 = vpop.permute.xlu0 %521
        %v524 = vperm.slane %v522, 0
        %v525 = vmul.f32 %v524, %v453
        %v527 = vrot.slane %v525, 6
        %v529 = vadd.f32 %v519, %v527
        %530 = vset.pattern.permute.xlu0 7
        %531 = vperm.xlu0 %530, %v454
        %v532 = vpop.permute.xlu0 %531
        %v534 = vperm.slane %v532, 0
        %v535 = vmul.f32 %v534, %v453
        %v537 = vrot.slane %v535, 7
        %v539 = vadd.f32 %v529, %v537
        %v540 = vsub.f32 0.0, %v539
        %v541 = vmul.f32 %v540, 1.442695
        %v542 = vpow.pop %v541
        %v543 = vadd.f32 %v542, 1.0
        %v544 = vrcp.pop %v543
        %545 = vst [vmem:[%s270] sm:$0x1] %v544
        %s546 = sand.u32 %s183, 1
        %s547 = scalar_lea.sflag [#allocation4], %s546
        %s548 = sand.u32 %s183, 1
        %s549 = scalar_lea.vmem [#allocation3], %s548
        // Predicated region
        $region49: #{tpu_custom_call.1} parent=47 // pred_check
          %p550 = pneg %p193
        $region50: #{tpu_custom_call.1} parent=47 // pred_check_branch
          %552 = sbr.rel (%p550) target = $region52
        $region51: #{tpu_custom_call.1} parent=47 // pred_region
          %554 = vsyncadd %s547, 0
          %s555 = scalar_lea.hbm %s7, %s23
          %s557 = sshll.u32 %s549, 4
          %s558 = int_to_ptr.vmem [resolvable:$true] %s557
          %s559 = sshll.u32 %s555, 4
          %s560 = int_to_ptr.hbm [resolvable:$true] %s559
          %562 = dma.vmem_to_hbm [thread:$0]  %s558, 16, %s560, %s547
        $region52: #{tpu_custom_call.1} parent=47 // pred_fallthru
          _
      $region48: #{tpu_custom_call.1} parent=5 // pred_fallthru
        _
      %p563 = scmp.le.s32.totalorder 2, %s18
      // Predicated region
      $region53: #{tpu_custom_call.1} parent=5 // pred_check
        %p564 = pneg %p563
      $region54: #{tpu_custom_call.1} parent=5 // pred_check_branch
        %566 = sbr.rel (%p564) target = $region56
      $region55: #{tpu_custom_call.1} parent=5 // pred_region
        %s567 = ssub.s32 %s18, 2
        // Predicated region
        $region57: #{tpu_custom_call.1} parent=55 // pred_check
          %p568 = pneg %p199
        $region58: #{tpu_custom_call.1} parent=55 // pred_check_branch
          %570 = sbr.rel (%p568) target = $region60
        $region59: #{tpu_custom_call.1} parent=55 // pred_region
          %s571 = sand.u32 %s184, 1
          %s572 = scalar_lea.sflag [#allocation4], %s571
          %s573 = sand.u32 %s184, 1
          %s574 = scalar_lea.vmem [#allocation3], %s573
          %576 = dma.done %s572, 16
        $region60: #{tpu_custom_call.1} parent=55 // pred_fallthru
          _
      $region56: #{tpu_custom_call.1} parent=5 // pred_fallthru
        _
    $region6: #{tpu_custom_call.1} parent=1 // loop_footer
      %s22 = sadd.s32 1, %s18
    $region7: #{tpu_custom_call.1} parent=1 // loop_footer_branch
      %17 = sbr.rel target = $region3
    $region8: #{tpu_custom_call.1} parent=1 // loop_exit
      _
    %577 = vsyncpa [#allocation4], 1
    %s578 = scalar_lea.sflag [#allocation4], 1
    %579 = vsyncpa %s578, 1

</llo_original>
